<compile_context>
chip_gen: v7x
topology: tpu7x:2x2x1
jax: 0.10.0
libtpu: 0.0.40
codegen_flags: <defaults>
</compile_context>

<pallas_src>
import math

import jax
import jax.numpy as jnp
from jax.experimental import pallas as pl
from jax.experimental.pallas import tpu as pltpu


def _gelu_tanh(x):
    # tanh-form GELU: 0.5*x*(1 + tanh(sqrt(2/pi)*(x + 0.044715*x^3))).
    # tanh runs on the EUP (its own bundle slot); the rest is a few VPU ops.
    c = 0.7978845608028654  # sqrt(2/pi)
    return 0.5 * x * (1.0 + jnp.tanh(c * (x + 0.044715 * x * x * x)))


def mlp_kernel(x_ref, w1_ref, b1_ref, w2_ref, b2_ref, o_ref):
    """out = GELU(x @ W1 + b1) @ W2 + b2 for one row tile.

    x_ref : (TM, D_IN)     f32 row tile (B*S rows folded into M)
    w1_ref: (D_IN, D_HID)  bf16 fc1 weight, pre-transposed to (in, hidden)
    b1_ref: (1, D_HID)     f32
    w2_ref: (D_HID, D_OUT) bf16 fc2 weight, pre-transposed to (hidden, out)
    b2_ref: (1, D_OUT)     f32
    o_ref : (TM, D_OUT)    f32
    """
    x_bf16 = x_ref[...].astype(jnp.bfloat16)
    h = jnp.dot(x_bf16, w1_ref[...], preferred_element_type=jnp.float32)
    h = _gelu_tanh(h + b1_ref[...])                      # f32 elementwise
    # TODO(synk): training-mode dropout (nn.Dropout(1.0 - dropout)) omitted;
    # dropout is the identity in eval/inference, which is what we implement.
    o = jnp.dot(h.astype(jnp.bfloat16), w2_ref[...],
                preferred_element_type=jnp.float32)
    o_ref[...] = (o + b2_ref[...]).astype(o_ref.dtype)


def prepare_mlp_params(w1, b1, w2, b2):
    """One-time parameter prep (transpose to (in, out) layout, cast to bf16).

    Hoisted out of the forward so the per-call critical path carries no
    XLA transpose/convert HBM round trips.
    """
    return {
        "w1_t": jnp.transpose(w1).astype(jnp.bfloat16),   # (d_in, d_hid)
        "b1": b1.reshape(1, -1).astype(jnp.float32),      # (1, d_hid)
        "w2_t": jnp.transpose(w2).astype(jnp.bfloat16),   # (d_hid, d_out)
        "b2": b2.reshape(1, -1).astype(jnp.float32),      # (1, d_out)
    }


def mlp_forward(x, params, *, block_rows=512):
    """MLP.forward (eval mode). x: (B, S, D_in); params from prepare_mlp_params."""
    w1_t, b1_2 = params["w1_t"], params["b1"]
    w2_t, b2_2 = params["w2_t"], params["b2"]

    B, S, d_in = x.shape
    d_hid = w1_t.shape[1]
    d_out = w2_t.shape[1]

    m = B * S
    x2 = x.reshape(m, d_in)

    # Row tile: multiple of 8 sublanes; one grid step at small M, many
    # "parallel" steps at production M (so v7x's two TCs both get work).
    tm = min(block_rows, max(8, ((m + 7) // 8) * 8))
    m_pad = ((m + tm - 1) // tm) * tm
    if m_pad != m:
        # Only taken for ragged M; a masked last tile would avoid this copy.
        x2 = jnp.pad(x2, ((0, m_pad - m), (0, 0)))

    flops = 2 * m_pad * (d_in * d_hid + d_hid * d_out)
    bytes_accessed = (m_pad * d_in * 4 + m_pad * d_out * 4 +
                      d_in * d_hid * 2 + d_hid * d_out * 2 +
                      (d_hid + d_out) * 4)
    cost = pl.CostEstimate(flops=flops,
                           transcendentals=m_pad * d_hid,   # one tanh per hidden elem
                           bytes_accessed=bytes_accessed)

    out = pl.pallas_call(
        mlp_kernel,
        out_shape=jax.ShapeDtypeStruct((m_pad, d_out), jnp.float32),
        grid=(m_pad // tm,),
        in_specs=[
            pl.BlockSpec((tm, d_in), lambda i: (i, 0)),
            pl.BlockSpec((d_in, d_hid), lambda i: (0, 0)),   # resident across tiles
            pl.BlockSpec((1, d_hid), lambda i: (0, 0)),
            pl.BlockSpec((d_hid, d_out), lambda i: (0, 0)),  # resident across tiles
            pl.BlockSpec((1, d_out), lambda i: (0, 0)),
        ],
        out_specs=pl.BlockSpec((tm, d_out), lambda i: (i, 0)),
        compiler_params=pltpu.CompilerParams(
            dimension_semantics=("parallel",)),
        cost_estimate=cost,
    )(x2, w1_t, b1_2, w2_t, b2_2)

    return out[:m].reshape(B, S, d_out)


def mlp_reference(x, w1, b1, w2, b2):
    """Pure-JAX f32 reference (XLA), exact erf GELU, eval-mode dropout (identity)."""
    h = jnp.einsum("bsd,hd->bsh", x, w1) + b1
    h = jax.nn.gelu(h, approximate=False)
    return jnp.einsum("bsh,oh->bso", h, w2) + b2


if __name__ == "__main__":
    key = jax.random.PRNGKey(0)
    kx, kw1, kb1, kw2, kb2 = jax.random.split(key, 5)

    # Small ViT-style MLP shapes: batch=2, seq=8, dim=128, hidden=4*dim=512.
    B, S = 2, 8
    D_IN, D_HID, D_OUT = 128, 512, 128   # out_features defaults to in_features

    x = jax.random.normal(kx, (B, S, D_IN), jnp.float32)
    # Deterministic synthetic nn.Linear parameters (PyTorch (out, in) layout).
    w1 = jax.random.normal(kw1, (D_HID, D_IN), jnp.float32) * (1.0 / math.sqrt(D_IN))
    b1 = jax.random.normal(kb1, (D_HID,), jnp.float32) * 0.02
    w2 = jax.random.normal(kw2, (D_OUT, D_HID), jnp.float32) * (1.0 / math.sqrt(D_HID))
    b2 = jax.random.normal(kb2, (D_OUT,), jnp.float32) * 0.02

    params = prepare_mlp_params(w1, b1, w2, b2)          # one-time prep

    out = jax.jit(mlp_forward)(x, params)
    out = jax.block_until_ready(out)
    ref = jax.block_until_ready(mlp_reference(x, w1, b1, w2, b2))

    assert out.shape == (B, S, D_OUT), (out.shape, (B, S, D_OUT))
    # Tolerance loosened for bf16 MXU operands + tanh-form GELU vs. the
    # f32 exact-erf reference.
    max_err = float(jnp.max(jnp.abs(out - ref)))
    assert jnp.allclose(out, ref, rtol=5e-2, atol=5e-2), max_err
    print("KERNEL_OK")
</pallas_src>

<mosaic_0001>
module attributes {stable_mosaic.version = 11 : i64} {
  func.func @mlp_kernel(%arg0: i32, %arg1: memref<16x128xf32, #tpu.memory_space<vmem>>, %arg2: memref<128x512xbf16, #tpu.memory_space<vmem>>, %arg3: memref<1x512xf32, #tpu.memory_space<vmem>>, %arg4: memref<512x128xbf16, #tpu.memory_space<vmem>>, %arg5: memref<1x128xf32, #tpu.memory_space<vmem>>, %arg6: memref<16x128xf32, #tpu.memory_space<vmem>>) attributes {dimension_semantics = [#tpu.dimension_semantics<parallel>], iteration_bounds = array<i64: 1>, scalar_prefetch = 0 : i64, scratch_operands = 0 : i64, tpu.core_type = #tpu.core_type<tc>, window_params = [{transform_indices = @transform_0, window_bounds = array<i64: 16, 128>}, {pipeline_mode = #tpu.pipeline_mode<synchronous>, transform_indices = @transform_1, window_bounds = array<i64: 128, 512>}, {pipeline_mode = #tpu.pipeline_mode<synchronous>, transform_indices = @transform_2, window_bounds = array<i64: 1, 512>}, {pipeline_mode = #tpu.pipeline_mode<synchronous>, transform_indices = @transform_3, window_bounds = array<i64: 512, 128>}, {pipeline_mode = #tpu.pipeline_mode<synchronous>, transform_indices = @transform_4, window_bounds = array<i64: 1, 128>}, {transform_indices = @transform_5, window_bounds = array<i64: 16, 128>}]} {
    %c0 = arith.constant 0 : index
    %c0_0 = arith.constant 0 : index
    %0 = vector.load %arg1[%c0, %c0_0] : memref<16x128xf32, #tpu.memory_space<vmem>>, vector<16x128xf32>
    %1 = arith.truncf %0 : vector<16x128xf32> to vector<16x128xbf16>
    %c0_1 = arith.constant 0 : index
    %c0_2 = arith.constant 0 : index
    %2 = vector.load %arg2[%c0_1, %c0_2] : memref<128x512xbf16, #tpu.memory_space<vmem>>, vector<128x512xbf16>
    %cst = arith.constant dense<0.000000e+00> : vector<16x512xf32>
    %3 = tpu.matmul %1, %2, %cst {dimension_numbers = #tpu.dot_dimension_numbers<[1], [0], [0], [1], [0, 0, 1, 1], [], []>} : vector<16x128xbf16>, vector<128x512xbf16>, vector<16x512xf32> -> vector<16x512xf32>
    %c0_3 = arith.constant 0 : index
    %c0_4 = arith.constant 0 : index
    %4 = vector.load %arg3[%c0_3, %c0_4] : memref<1x512xf32, #tpu.memory_space<vmem>>, vector<1x512xf32>
    %5 = vector.broadcast %4 : vector<1x512xf32> to vector<16x512xf32>
    %6 = arith.addf %3, %5 : vector<16x512xf32>
    %cst_5 = arith.constant 5.000000e-01 : f32
    %7 = vector.broadcast %cst_5 : f32 to vector<16x512xf32>
    %8 = arith.mulf %7, %6 : vector<16x512xf32>
    %cst_6 = arith.constant 4.471500e-02 : f32
    %9 = vector.broadcast %cst_6 : f32 to vector<16x512xf32>
    %10 = arith.mulf %9, %6 : vector<16x512xf32>
    %11 = arith.mulf %10, %6 : vector<16x512xf32>
    %12 = arith.mulf %11, %6 : vector<16x512xf32>
    %13 = arith.addf %6, %12 : vector<16x512xf32>
    %cst_7 = arith.constant 0.797884583 : f32
    %14 = vector.broadcast %cst_7 : f32 to vector<16x512xf32>
    %15 = arith.mulf %14, %13 : vector<16x512xf32>
    %16 = math.tanh %15 : vector<16x512xf32>
    %cst_8 = arith.constant 1.000000e+00 : f32
    %17 = vector.broadcast %cst_8 : f32 to vector<16x512xf32>
    %18 = arith.addf %17, %16 : vector<16x512xf32>
    %19 = arith.mulf %8, %18 : vector<16x512xf32>
    %20 = arith.truncf %19 : vector<16x512xf32> to vector<16x512xbf16>
    %c0_9 = arith.constant 0 : index
    %c0_10 = arith.constant 0 : index
    %21 = vector.load %arg4[%c0_9, %c0_10] : memref<512x128xbf16, #tpu.memory_space<vmem>>, vector<512x128xbf16>
    %cst_11 = arith.constant dense<0.000000e+00> : vector<16x128xf32>
    %22 = tpu.matmul %20, %21, %cst_11 {dimension_numbers = #tpu.dot_dimension_numbers<[1], [0], [0], [1], [0, 0, 1, 1], [], []>} : vector<16x512xbf16>, vector<512x128xbf16>, vector<16x128xf32> -> vector<16x128xf32>
    %c0_12 = arith.constant 0 : index
    %c0_13 = arith.constant 0 : index
    %23 = vector.load %arg5[%c0_12, %c0_13] : memref<1x128xf32, #tpu.memory_space<vmem>>, vector<1x128xf32>
    %24 = vector.broadcast %23 : vector<1x128xf32> to vector<16x128xf32>
    %25 = arith.addf %22, %24 : vector<16x128xf32>
    %c0_14 = arith.constant 0 : index
    %c0_15 = arith.constant 0 : index
    %26 = vector.load %arg6[%c0_14, %c0_15] : memref<16x128xf32, #tpu.memory_space<vmem>>, vector<16x128xf32>
    tpu.vector_store %arg6[%c0_14, %c0_15], %25 {strides = array<i32>} : memref<16x128xf32, #tpu.memory_space<vmem>>, vector<16x128xf32>,
    return
  }
  func.func @transform_0(%arg0: i32) -> (i32, i32) {
    %c0_i32 = arith.constant 0 : i32
    %c0_i32_0 = arith.constant 0 : i32
    return %arg0, %c0_i32 : i32, i32
  }
  func.func @transform_1(%arg0: i32) -> (i32, i32) {
    %c0_i32 = arith.constant 0 : i32
    %c0_i32_0 = arith.constant 0 : i32
    %c0_i32_1 = arith.constant 0 : i32
    return %c0_i32, %c0_i32_0 : i32, i32
  }
  func.func @transform_2(%arg0: i32) -> (i32, i32) {
    %c0_i32 = arith.constant 0 : i32
    %c0_i32_0 = arith.constant 0 : i32
    %c0_i32_1 = arith.constant 0 : i32
    return %c0_i32, %c0_i32_0 : i32, i32
  }
  func.func @transform_3(%arg0: i32) -> (i32, i32) {
    %c0_i32 = arith.constant 0 : i32
    %c0_i32_0 = arith.constant 0 : i32
    %c0_i32_1 = arith.constant 0 : i32
    return %c0_i32, %c0_i32_0 : i32, i32
  }
  func.func @transform_4(%arg0: i32) -> (i32, i32) {
    %c0_i32 = arith.constant 0 : i32
    %c0_i32_0 = arith.constant 0 : i32
    %c0_i32_1 = arith.constant 0 : i32
    return %c0_i32, %c0_i32_0 : i32, i32
  }
  func.func @transform_5(%arg0: i32) -> (i32, i32) {
    %c0_i32 = arith.constant 0 : i32
    %c0_i32_0 = arith.constant 0 : i32
    return %arg0, %c0_i32 : i32, i32
  }
}

</mosaic_0001>

<llo_original>
// kernel: mlp_forward.1
$region0: #{mlp_forward.1}
  #allocation0 [shape = 'u32[]', space=smem, size = 0x4, offset = 0x4, fixed_abs, tag = 'smem constant byte address 0x4 - core index']
  #allocation1 [shape = 'u32[144,128]{1,0:T(1,128)}', space=vmem, size = 0x12000, scoped, tag = 'internal scratch']
  %s0 = inlined_call_operand.hbm [shape: f32[16,128], index: 0, kind: input, shape index: {}]
  %s1 = inlined_call_operand.hbm [shape: bf16[128,512], index: 1, kind: input, shape index: {}]
  %s2 = inlined_call_operand.vmem [shape: f32[1,512], index: 2, kind: input, shape index: {}]
  %s3 = inlined_call_operand.hbm [shape: bf16[512,128], index: 3, kind: input, shape index: {}]
  %s4 = inlined_call_operand.vmem [shape: f32[1,128], index: 4, kind: input, shape index: {}]
  %s5 = inlined_call_operand.hbm [shape: f32[16,128], index: 5, kind: output, shape index: {}]
  %s6 = sld [smem:[#allocation0]]
  $region42: #{mlp_forward.1} parent=0
    _
  %s8 = ssub.s32 1, %s6
  %s9 = scalar_select 0, %s8, %s6
  $region1: #{mlp_forward.1} parent=0
    #allocation2 [shape = 'u8[8192]{0}', space=vmem, size = 0x2000, scoped, tag = 'input window, operand 0, single buffered']
    #allocation3 [shape = 's32[1]{0}', space=sflag, size = 0x4, scoped, tag = 'scoped memory for mlp_forward.1']
    #allocation4 [shape = 's32[1]{0}', space=sflag, size = 0x4, scoped, tag = 'scoped memory for mlp_forward.1']
    #allocation5 [shape = 'u8[131072]{0}', space=vmem, size = 0x20000, scoped, tag = 'input window, operand 1, single buffered']
    #allocation6 [shape = 's32[1]{0}', space=sflag, size = 0x4, scoped, tag = 'scoped memory for mlp_forward.1']
    #allocation7 [shape = 'u8[131072]{0}', space=vmem, size = 0x20000, scoped, tag = 'input window, operand 3, single buffered']
    #allocation8 [shape = 'u8[8192]{0}', space=vmem, size = 0x2000, scoped, tag = 'output window, operand 0, single buffered']
    %10 = vsyncpa [#allocation3], 0
    %11 = vsyncpa [#allocation6], 0
    %12 = vsyncpa [#allocation4], 0
    // Predicated region
    $region2: #{mlp_forward.1} parent=1 // pred_check
      _
    $region3: #{mlp_forward.1} parent=1 // pred_check_branch
      %14 = sbr.rel (0) target = $region5
    $region4: #{mlp_forward.1} parent=1 // pred_region
      %s16 = ssub.s32 256, 256
      %17 = vsyncadd [#allocation3], %s16
      %s18 = sshll.u32 [#allocation2], 4
      %s19 = int_to_ptr.vmem [resolvable:$true] %s18
      %24 = dma.hbm_to_vmem [thread:$0]  %s0, 256, %s19, [#allocation3], 128, 128, 8
    $region5: #{mlp_forward.1} parent=1 // pred_fallthru
      _
    // Predicated region
    $region6: #{mlp_forward.1} parent=1 // pred_check
      _
    $region7: #{mlp_forward.1} parent=1 // pred_check_branch
      %26 = sbr.rel (0) target = $region9
    $region8: #{mlp_forward.1} parent=1 // pred_region
      %s28 = ssub.s32 4096, 4096
      %29 = vsyncadd [#allocation6], %s28
      %s30 = sshll.u32 [#allocation5], 4
      %s31 = int_to_ptr.vmem [resolvable:$true] %s30
      %36 = dma.hbm_to_vmem [thread:$0]  %s1, 4096, %s31, [#allocation6], 256, 256, 16
    $region9: #{mlp_forward.1} parent=1 // pred_fallthru
      _
    // Predicated region
    $region10: #{mlp_forward.1} parent=1 // pred_check
      _
    $region11: #{mlp_forward.1} parent=1 // pred_check_branch
      %38 = sbr.rel (0) target = $region13
    $region12: #{mlp_forward.1} parent=1 // pred_region
      _
    $region13: #{mlp_forward.1} parent=1 // pred_fallthru
      _
    // Predicated region
    $region14: #{mlp_forward.1} parent=1 // pred_check
      _
    $region15: #{mlp_forward.1} parent=1 // pred_check_branch
      %40 = sbr.rel (0) target = $region17
    $region16: #{mlp_forward.1} parent=1 // pred_region
      %s42 = ssub.s32 4096, 4096
      %43 = vsyncadd [#allocation6], %s42
      %s44 = sshll.u32 [#allocation7], 4
      %s45 = int_to_ptr.vmem [resolvable:$true] %s44
      %50 = dma.hbm_to_vmem [thread:$0]  %s3, 4096, %s45, [#allocation6], 64, 64, 4
    $region17: #{mlp_forward.1} parent=1 // pred_fallthru
      _
    // Predicated region
    $region18: #{mlp_forward.1} parent=1 // pred_check
      _
    $region19: #{mlp_forward.1} parent=1 // pred_check_branch
      %52 = sbr.rel (0) target = $region21
    $region20: #{mlp_forward.1} parent=1 // pred_region
      _
    $region21: #{mlp_forward.1} parent=1 // pred_fallthru
      _
    // Predicated region
    $region22: #{mlp_forward.1} parent=1 // pred_check
      _
    $region23: #{mlp_forward.1} parent=1 // pred_check_branch
      %54 = sbr.rel (0) target = $region25
    $region24: #{mlp_forward.1} parent=1 // pred_region
      %55 = dma.done [#allocation3], 256
    $region25: #{mlp_forward.1} parent=1 // pred_fallthru
      _
    // Predicated region
    $region26: #{mlp_forward.1} parent=1 // pred_check
      _
    $region27: #{mlp_forward.1} parent=1 // pred_check_branch
      %57 = sbr.rel (0) target = $region29
    $region28: #{mlp_forward.1} parent=1 // pred_region
      %58 = dma.done [#allocation6], 4096
    $region29: #{mlp_forward.1} parent=1 // pred_fallthru
      _
    // Predicated region
    $region30: #{mlp_forward.1} parent=1 // pred_check
      _
    $region31: #{mlp_forward.1} parent=1 // pred_check_branch
      %60 = sbr.rel (0) target = $region33
    $region32: #{mlp_forward.1} parent=1 // pred_region
      %61 = dma.done [#allocation6], 4096
    $region33: #{mlp_forward.1} parent=1 // pred_fallthru
      _
    %v63 = vld [vmem:[#allocation2] sm:$0xff]
    %v64 = vld [vmem:[#allocation2 + $0x8] sm:$0xff]
    %v65 = vpack.c.bf16 %v64, %v63
    %v66 = vld [vmem:[#allocation5] sm:$0xff]
    %v67 = vld [vmem:[#allocation5 + $0x8] sm:$0xff]
    %v68 = vld [vmem:[#allocation5 + $0x10] sm:$0xff]
    %v69 = vld [vmem:[#allocation5 + $0x18] sm:$0xff]
    %v70 = vld [vmem:[#allocation5 + $0x20] sm:$0xff]
    %v71 = vld [vmem:[#allocation5 + $0x28] sm:$0xff]
    %v72 = vld [vmem:[#allocation5 + $0x30] sm:$0xff]
    %v73 = vld [vmem:[#allocation5 + $0x38] sm:$0xff]
    %v74 = vld [vmem:[#allocation5 + $0x40] sm:$0xff]
    %v75 = vld [vmem:[#allocation5 + $0x48] sm:$0xff]
    %v76 = vld [vmem:[#allocation5 + $0x50] sm:$0xff]
    %v77 = vld [vmem:[#allocation5 + $0x58] sm:$0xff]
    %v78 = vld [vmem:[#allocation5 + $0x60] sm:$0xff]
    %v79 = vld [vmem:[#allocation5 + $0x68] sm:$0xff]
    %v80 = vld [vmem:[#allocation5 + $0x70] sm:$0xff]
    %v81 = vld [vmem:[#allocation5 + $0x78] sm:$0xff]
    %v82 = vld [vmem:[#allocation5 + $0x80] sm:$0xff]
    %v83 = vld [vmem:[#allocation5 + $0x88] sm:$0xff]
    %v84 = vld [vmem:[#allocation5 + $0x90] sm:$0xff]
    %v85 = vld [vmem:[#allocation5 + $0x98] sm:$0xff]
    %v86 = vld [vmem:[#allocation5 + $0xa0] sm:$0xff]
    %v87 = vld [vmem:[#allocation5 + $0xa8] sm:$0xff]
    %v88 = vld [vmem:[#allocation5 + $0xb0] sm:$0xff]
    %v89 = vld [vmem:[#allocation5 + $0xb8] sm:$0xff]
    %v90 = vld [vmem:[#allocation5 + $0xc0] sm:$0xff]
    %v91 = vld [vmem:[#allocation5 + $0xc8] sm:$0xff]
    %v92 = vld [vmem:[#allocation5 + $0xd0] sm:$0xff]
    %v93 = vld [vmem:[#allocation5 + $0xd8] sm:$0xff]
    %v94 = vld [vmem:[#allocation5 + $0xe0] sm:$0xff]
    %v95 = vld [vmem:[#allocation5 + $0xe8] sm:$0xff]
    %v96 = vld [vmem:[#allocation5 + $0xf0] sm:$0xff]
    %v97 = vld [vmem:[#allocation5 + $0xf8] sm:$0xff]
    %v98 = vld [vmem:[%s2] sm:$0xf]
    %v100 = vlaneseq
    %v101 = vshrl.u32 %v100, 7
    %v102 = vsub.s32 0, %v101
    %v103 = vrot.slane %v98, %v102
    %v104 = vlaneseq
    %v105 = vshrl.u32 %v104, 7
    %v106 = vsub.s32 1, %v105
    %v107 = vrot.slane %v98, %v106
    %v108 = vlaneseq
    %v109 = vshrl.u32 %v108, 7
    %v110 = vsub.s32 2, %v109
    %v111 = vrot.slane %v98, %v110
    %v112 = vlaneseq
    %v113 = vshrl.u32 %v112, 7
    %v114 = vsub.s32 3, %v113
    %v115 = vrot.slane %v98, %v114
    %v152 = vunpack.c.l.b16 %v66
    %v153 = vunpack.c.h.b16 %v66
    %v154 = vunpack.c.l.b16 %v67
    %v155 = vunpack.c.h.b16 %v67
    %v156 = vunpack.c.l.b16 %v68
    %v157 = vunpack.c.h.b16 %v68
    %v158 = vunpack.c.l.b16 %v69
    %v159 = vunpack.c.h.b16 %v69
    %v160 = vunpack.c.l.b16 %v70
    %v161 = vunpack.c.h.b16 %v70
    %v162 = vunpack.c.l.b16 %v71
    %v163 = vunpack.c.h.b16 %v71
    %v164 = vunpack.c.l.b16 %v72
    %v165 = vunpack.c.h.b16 %v72
    %v166 = vunpack.c.l.b16 %v73
    %v167 = vunpack.c.h.b16 %v73
    %v168 = vunpack.c.l.b16 %v74
    %v169 = vunpack.c.h.b16 %v74
    %v170 = vunpack.c.l.b16 %v75
    %v171 = vunpack.c.h.b16 %v75
    %v172 = vunpack.c.l.b16 %v76
    %v173 = vunpack.c.h.b16 %v76
    %v174 = vunpack.c.l.b16 %v77
    %v175 = vunpack.c.h.b16 %v77
    %v176 = vunpack.c.l.b16 %v78
    %v177 = vunpack.c.h.b16 %v78
    %v178 = vunpack.c.l.b16 %v79
    %v179 = vunpack.c.h.b16 %v79
    %v180 = vunpack.c.l.b16 %v80
    %v181 = vunpack.c.h.b16 %v80
    %v182 = vunpack.c.l.b16 %v81
    %v183 = vunpack.c.h.b16 %v81
    %v184 = vunpack.c.l.b16 %v82
    %v185 = vunpack.c.h.b16 %v82
    %v186 = vunpack.c.l.b16 %v83
    %v187 = vunpack.c.h.b16 %v83
    %v188 = vunpack.c.l.b16 %v84
    %v189 = vunpack.c.h.b16 %v84
    %v190 = vunpack.c.l.b16 %v85
    %v191 = vunpack.c.h.b16 %v85
    %v192 = vunpack.c.l.b16 %v86
    %v193 = vunpack.c.h.b16 %v86
    %v194 = vunpack.c.l.b16 %v87
    %v195 = vunpack.c.h.b16 %v87
    %v196 = vunpack.c.l.b16 %v88
    %v197 = vunpack.c.h.b16 %v88
    %v198 = vunpack.c.l.b16 %v89
    %v199 = vunpack.c.h.b16 %v89
    %v200 = vunpack.c.l.b16 %v90
    %v201 = vunpack.c.h.b16 %v90
    %v202 = vunpack.c.l.b16 %v91
    %v203 = vunpack.c.h.b16 %v91
    %v204 = vunpack.c.l.b16 %v92
    %v205 = vunpack.c.h.b16 %v92
    %v206 = vunpack.c.l.b16 %v93
    %v207 = vunpack.c.h.b16 %v93
    %v208 = vunpack.c.l.b16 %v94
    %v209 = vunpack.c.h.b16 %v94
    %v210 = vunpack.c.l.b16 %v95
    %v211 = vunpack.c.h.b16 %v95
    %v212 = vunpack.c.l.b16 %v96
    %v213 = vunpack.c.h.b16 %v96
    %v214 = vunpack.c.l.b16 %v97
    %v215 = vunpack.c.h.b16 %v97
    %v216 = vpack.c.b16 %v156, %v152
    %v217 = vpack.c.b16 %v157, %v153
    %v218 = vpack.c.b16 %v158, %v154
    %v219 = vpack.c.b16 %v159, %v155
    %v220 = vpack.c.b16 %v164, %v160
    %v221 = vpack.c.b16 %v165, %v161
    %v222 = vpack.c.b16 %v166, %v162
    %v223 = vpack.c.b16 %v167, %v163
    %v224 = vpack.c.b16 %v172, %v168
    %v225 = vpack.c.b16 %v173, %v169
    %v226 = vpack.c.b16 %v174, %v170
    %v227 = vpack.c.b16 %v175, %v171
    %v228 = vpack.c.b16 %v180, %v176
    %v229 = vpack.c.b16 %v181, %v177
    %v230 = vpack.c.b16 %v182, %v178
    %v231 = vpack.c.b16 %v183, %v179
    %v232 = vpack.c.b16 %v188, %v184
    %v233 = vpack.c.b16 %v189, %v185
    %v234 = vpack.c.b16 %v190, %v186
    %v235 = vpack.c.b16 %v191, %v187
    %v236 = vpack.c.b16 %v196, %v192
    %v237 = vpack.c.b16 %v197, %v193
    %v238 = vpack.c.b16 %v198, %v194
    %v239 = vpack.c.b16 %v199, %v195
    %v240 = vpack.c.b16 %v204, %v200
    %v241 = vpack.c.b16 %v205, %v201
    %v242 = vpack.c.b16 %v206, %v202
    %v243 = vpack.c.b16 %v207, %v203
    %v244 = vpack.c.b16 %v212, %v208
    %v245 = vpack.c.b16 %v213, %v209
    %v246 = vpack.c.b16 %v214, %v210
    %v247 = vpack.c.b16 %v215, %v211
    %280 = vmatprep.subr.bf16.mxu0 %v217
    %281 = vmatpush1.bf16.msra.mxu0 %v216
    %282 = vmatprep.subr.bf16.mxu0 %v221
    %283 = vmatpush1.bf16.msra.mxu0 %v220
    %284 = vmatprep.subr.bf16.mxu0 %v225
    %285 = vmatpush1.bf16.msra.mxu0 %v224
    %286 = vmatprep.subr.bf16.mxu0 %v229
    %287 = vmatpush1.bf16.msra.mxu0 %v228
    %288 = vmatprep.subr.bf16.mxu0 %v233
    %289 = vmatpush1.bf16.msra.mxu0 %v232
    %290 = vmatprep.subr.bf16.mxu0 %v237
    %291 = vmatpush1.bf16.msra.mxu0 %v236
    %292 = vmatprep.subr.bf16.mxu0 %v241
    %293 = vmatpush1.bf16.msra.mxu0 %v240
    %294 = vmatprep.subr.bf16.mxu0 %v245
    %295 = vmatpush1.bf16.msra.mxu0 %v244
    %296 = vmatprep.subr.bf16.mxu0 0
    %297 = vmatpush1.bf16.msra.mxu0 0
    %298 = vmatprep.subr.bf16.mxu0 0
    %299 = vmatpush1.bf16.msra.mxu0 0
    %300 = vmatprep.subr.bf16.mxu0 0
    %301 = vmatpush1.bf16.msra.mxu0 0
    %302 = vmatprep.subr.bf16.mxu0 0
    %303 = vmatpush1.bf16.msra.mxu0 0
    %304 = vmatprep.subr.bf16.mxu0 0
    %305 = vmatpush1.bf16.msra.mxu0 0
    %306 = vmatprep.subr.bf16.mxu0 0
    %307 = vmatpush1.bf16.msra.mxu0 0
    %308 = vmatprep.subr.bf16.mxu0 0
    %309 = vmatpush1.bf16.msra.mxu0 0
    %310 = vmatprep.subr.bf16.mxu0 0
    %311 = vmatpush1.bf16.msra.mxu0 0
    %312 = vmatprep.mubr.bf16.mxu0 0
    %313 = vmatmul.mubr.bf16.gmra.mrb[0].mxu0 %v65
    %v314 = vpop.f32.mrb[0].mxu0
    %v315 = vadd.f32 %v103, %v314
    %v316 = vpop.f32.mrb[0].mxu0
    %v317 = vadd.f32 %v107, %v316
    %v318 = vpop.f32.mrb[0].mxu0
    %v319 = vadd.f32 %v103, %v318
    %v320 = vpop.f32.mrb[0].mxu0
    %v321 = vadd.f32 %v107, %v320
    %322 = vdwg.mxu0
    %323 = vmatprep.subr.bf16.mxu0 %v219
    %324 = vmatpush1.bf16.msra.mxu0 %v218
    %325 = vmatprep.subr.bf16.mxu0 %v223
    %326 = vmatpush1.bf16.msra.mxu0 %v222
    %327 = vmatprep.subr.bf16.mxu0 %v227
    %328 = vmatpush1.bf16.msra.mxu0 %v226
    %329 = vmatprep.subr.bf16.mxu0 %v231
    %330 = vmatpush1.bf16.msra.mxu0 %v230
    %331 = vmatprep.subr.bf16.mxu0 %v235
    %332 = vmatpush1.bf16.msra.mxu0 %v234
    %333 = vmatprep.subr.bf16.mxu0 %v239
    %334 = vmatpush1.bf16.msra.mxu0 %v238
    %335 = vmatprep.subr.bf16.mxu0 %v243
    %336 = vmatpush1.bf16.msra.mxu0 %v242
    %337 = vmatprep.subr.bf16.mxu0 %v247
    %338 = vmatpush1.bf16.msra.mxu0 %v246
    %339 = vmatprep.subr.bf16.mxu0 0
    %340 = vmatpush1.bf16.msra.mxu0 0
    %341 = vmatprep.subr.bf16.mxu0 0
    %342 = vmatpush1.bf16.msra.mxu0 0
    %343 = vmatprep.subr.bf16.mxu0 0
    %344 = vmatpush1.bf16.msra.mxu0 0
    %345 = vmatprep.subr.bf16.mxu0 0
    %346 = vmatpush1.bf16.msra.mxu0 0
    %347 = vmatprep.subr.bf16.mxu0 0
    %348 = vmatpush1.bf16.msra.mxu0 0
    %349 = vmatprep.subr.bf16.mxu0 0
    %350 = vmatpush1.bf16.msra.mxu0 0
    %351 = vmatprep.subr.bf16.mxu0 0
    %352 = vmatpush1.bf16.msra.mxu0 0
    %353 = vmatprep.subr.bf16.mxu0 0
    %354 = vmatpush1.bf16.msra.mxu0 0
    %355 = vmatprep.mubr.bf16.mxu0 0
    %356 = vmatmul.mubr.bf16.gmra.mrb[0].mxu0 %v65
    %v357 = vpop.f32.mrb[0].mxu0
    %v358 = vadd.f32 %v111, %v357
    %v359 = vpop.f32.mrb[0].mxu0
    %v360 = vadd.f32 %v115, %v359
    %v361 = vpop.f32.mrb[0].mxu0
    %v362 = vadd.f32 %v111, %v361
    %v363 = vpop.f32.mrb[0].mxu0
    %v364 = vadd.f32 %v115, %v363
    %365 = vdwg.mxu0
    %v366 = vmul.f32 %v315, 0.5
    %v367 = vmul.f32 %v317, 0.5
    %v368 = vmul.f32 %v358, 0.5
    %v369 = vmul.f32 %v360, 0.5
    %v370 = vmul.f32 %v319, 0.5
    %v371 = vmul.f32 %v321, 0.5
    %v372 = vmul.f32 %v362, 0.5
    %v373 = vmul.f32 %v364, 0.5
    %v374 = vmul.f32 %v315, 0.044715
    %v375 = vmul.f32 %v317, 0.044715
    %v376 = vmul.f32 %v358, 0.044715
    %v377 = vmul.f32 %v360, 0.044715
    %v378 = vmul.f32 %v319, 0.044715
    %v379 = vmul.f32 %v321, 0.044715
    %v380 = vmul.f32 %v362, 0.044715
    %v381 = vmul.f32 %v364, 0.044715
    %v382 = vmul.f32 %v374, %v315
    %v383 = vmul.f32 %v375, %v317
    %v384 = vmul.f32 %v376, %v358
    %v385 = vmul.f32 %v377, %v360
    %v386 = vmul.f32 %v378, %v319
    %v387 = vmul.f32 %v379, %v321
    %v388 = vmul.f32 %v380, %v362
    %v389 = vmul.f32 %v381, %v364
    %v390 = vmul.f32 %v382, %v315
    %v391 = vmul.f32 %v383, %v317
    %v392 = vmul.f32 %v384, %v358
    %v393 = vmul.f32 %v385, %v360
    %v394 = vmul.f32 %v386, %v319
    %v395 = vmul.f32 %v387, %v321
    %v396 = vmul.f32 %v388, %v362
    %v397 = vmul.f32 %v389, %v364
    %v398 = vadd.f32 %v315, %v390
    %v399 = vadd.f32 %v317, %v391
    %v400 = vadd.f32 %v358, %v392
    %v401 = vadd.f32 %v360, %v393
    %v402 = vadd.f32 %v319, %v394
    %v403 = vadd.f32 %v321, %v395
    %v404 = vadd.f32 %v362, %v396
    %v405 = vadd.f32 %v364, %v397
    %v406 = vmul.f32 %v398, 0.7978846
    %v407 = vmul.f32 %v399, 0.7978846
    %v408 = vmul.f32 %v400, 0.7978846
    %v409 = vmul.f32 %v401, 0.7978846
    %v410 = vmul.f32 %v402, 0.7978846
    %v411 = vmul.f32 %v403, 0.7978846
    %v412 = vmul.f32 %v404, 0.7978846
    %v413 = vmul.f32 %v405, 0.7978846
    %v414 = vtanh.pop %v406
    %v415 = vtanh.pop %v407
    %v416 = vtanh.pop %v408
    %v417 = vtanh.pop %v409
    %v418 = vtanh.pop %v410
    %v419 = vtanh.pop %v411
    %v420 = vtanh.pop %v412
    %v421 = vtanh.pop %v413
    %v422 = vadd.f32 %v414, 1.0
    %v423 = vadd.f32 %v415, 1.0
    %v424 = vadd.f32 %v416, 1.0
    %v425 = vadd.f32 %v417, 1.0
    %v426 = vadd.f32 %v418, 1.0
    %v427 = vadd.f32 %v419, 1.0
    %v428 = vadd.f32 %v420, 1.0
    %v429 = vadd.f32 %v421, 1.0
    %v430 = vmul.f32 %v366, %v422
    %v431 = vmul.f32 %v367, %v423
    %v432 = vmul.f32 %v368, %v424
    %v433 = vmul.f32 %v369, %v425
    %v434 = vmul.f32 %v370, %v426
    %v435 = vmul.f32 %v371, %v427
    %v436 = vmul.f32 %v372, %v428
    %v437 = vmul.f32 %v373, %v429
    %v438 = vpack.c.bf16 %v434, %v430
    %v439 = vpack.c.bf16 %v435, %v431
    %v440 = vpack.c.bf16 %v436, %v432
    %v441 = vpack.c.bf16 %v437, %v433
    %v442 = vld [vmem:[#allocation7] sm:$0xf]
    %v443 = vld [vmem:[#allocation7 + $0x4] sm:$0xf]
    %v444 = vld [vmem:[#allocation7 + $0x8] sm:$0xf]
    %v445 = vld [vmem:[#allocation7 + $0xc] sm:$0xf]
    %v446 = vld [vmem:[#allocation7 + $0x10] sm:$0xf]
    %v447 = vld [vmem:[#allocation7 + $0x14] sm:$0xf]
    %v448 = vld [vmem:[#allocation7 + $0x18] sm:$0xf]
    %v449 = vld [vmem:[#allocation7 + $0x1c] sm:$0xf]
    %v450 = vld [vmem:[#allocation7 + $0x20] sm:$0xf]
    %v451 = vld [vmem:[#allocation7 + $0x24] sm:$0xf]
    %v452 = vld [vmem:[#allocation7 + $0x28] sm:$0xf]
    %v453 = vld [vmem:[#allocation7 + $0x2c] sm:$0xf]
    %v454 = vld [vmem:[#allocation7 + $0x30] sm:$0xf]
    %v455 = vld [vmem:[#allocation7 + $0x34] sm:$0xf]
    %v456 = vld [vmem:[#allocation7 + $0x38] sm:$0xf]
    %v457 = vld [vmem:[#allocation7 + $0x3c] sm:$0xf]
    %v458 = vld [vmem:[#allocation7 + $0x40] sm:$0xf]
    %v459 = vld [vmem:[#allocation7 + $0x44] sm:$0xf]
    %v460 = vld [vmem:[#allocation7 + $0x48] sm:$0xf]
    %v461 = vld [vmem:[#allocation7 + $0x4c] sm:$0xf]
    %v462 = vld [vmem:[#allocation7 + $0x50] sm:$0xf]
    %v463 = vld [vmem:[#allocation7 + $0x54] sm:$0xf]
    %v464 = vld [vmem:[#allocation7 + $0x58] sm:$0xf]
    %v465 = vld [vmem:[#allocation7 + $0x5c] sm:$0xf]
    %v466 = vld [vmem:[#allocation7 + $0x60] sm:$0xf]
    %v467 = vld [vmem:[#allocation7 + $0x64] sm:$0xf]
    %v468 = vld [vmem:[#allocation7 + $0x68] sm:$0xf]
    %v469 = vld [vmem:[#allocation7 + $0x6c] sm:$0xf]
    %v470 = vld [vmem:[#allocation7 + $0x70] sm:$0xf]
    %v471 = vld [vmem:[#allocation7 + $0x74] sm:$0xf]
    %v472 = vld [vmem:[#allocation7 + $0x78] sm:$0xf]
    %v473 = vld [vmem:[#allocation7 + $0x7c] sm:$0xf]
    %v474 = vld [vmem:[#allocation7 + $0x80] sm:$0xf]
    %v475 = vld [vmem:[#allocation7 + $0x84] sm:$0xf]
    %v476 = vld [vmem:[#allocation7 + $0x88] sm:$0xf]
    %v477 = vld [vmem:[#allocation7 + $0x8c] sm:$0xf]
    %v478 = vld [vmem:[#allocation7 + $0x90] sm:$0xf]
    %v479 = vld [vmem:[#allocation7 + $0x94] sm:$0xf]
    %v480 = vld [vmem:[#allocation7 + $0x98] sm:$0xf]
    %v481 = vld [vmem:[#allocation7 + $0x9c] sm:$0xf]
    %v482 = vld [vmem:[#allocation7 + $0xa0] sm:$0xf]
    %v483 = vld [vmem:[#allocation7 + $0xa4] sm:$0xf]
    %v484 = vld [vmem:[#allocation7 + $0xa8] sm:$0xf]
    %v485 = vld [vmem:[#allocation7 + $0xac] sm:$0xf]
    %v486 = vld [vmem:[#allocation7 + $0xb0] sm:$0xf]
    %v487 = vld [vmem:[#allocation7 + $0xb4] sm:$0xf]
    %v488 = vld [vmem:[#allocation7 + $0xb8] sm:$0xf]
    %v489 = vld [vmem:[#allocation7 + $0xbc] sm:$0xf]
    %v490 = vld [vmem:[#allocation7 + $0xc0] sm:$0xf]
    %v491 = vld [vmem:[#allocation7 + $0xc4] sm:$0xf]
    %v492 = vld [vmem:[#allocation7 + $0xc8] sm:$0xf]
    %v493 = vld [vmem:[#allocation7 + $0xcc] sm:$0xf]
    %v494 = vld [vmem:[#allocation7 + $0xd0] sm:$0xf]
    %v495 = vld [vmem:[#allocation7 + $0xd4] sm:$0xf]
    %v496 = vld [vmem:[#allocation7 + $0xd8] sm:$0xf]
    %v497 = vld [vmem:[#allocation7 + $0xdc] sm:$0xf]
    %v498 = vld [vmem:[#allocation7 + $0xe0] sm:$0xf]
    %v499 = vld [vmem:[#allocation7 + $0xe4] sm:$0xf]
    %v500 = vld [vmem:[#allocation7 + $0xe8] sm:$0xf]
    %v501 = vld [vmem:[#allocation7 + $0xec] sm:$0xf]
    %v502 = vld [vmem:[#allocation7 + $0xf0] sm:$0xf]
    %v503 = vld [vmem:[#allocation7 + $0xf4] sm:$0xf]
    %v504 = vld [vmem:[#allocation7 + $0xf8] sm:$0xf]
    %v505 = vld [vmem:[#allocation7 + $0xfc] sm:$0xf]
    %v506 = vld [vmem:[%s4] sm:$0x1]
    %v508 = vlaneseq
    %v509 = vshrl.u32 %v508, 7
    %v510 = vsub.s32 0, %v509
    %v511 = vrot.slane %v506, %v510
    %v577 = vunpack.c.l.b16 %v442
    %v578 = vunpack.c.l.b16 %v443
    %v579 = vunpack.c.l.b16 %v444
    %v580 = vunpack.c.l.b16 %v445
    %v581 = vunpack.c.l.b16 %v446
    %v582 = vunpack.c.l.b16 %v447
    %v583 = vunpack.c.l.b16 %v448
    %v584 = vunpack.c.l.b16 %v449
    %v585 = vunpack.c.l.b16 %v450
    %v586 = vunpack.c.l.b16 %v451
    %v587 = vunpack.c.l.b16 %v452
    %v588 = vunpack.c.l.b16 %v453
    %v589 = vunpack.c.l.b16 %v454
    %v590 = vunpack.c.l.b16 %v455
    %v591 = vunpack.c.l.b16 %v456
    %v592 = vunpack.c.l.b16 %v457
    %v593 = vunpack.c.l.b16 %v458
    %v594 = vunpack.c.l.b16 %v459
    %v595 = vunpack.c.l.b16 %v460
    %v596 = vunpack.c.l.b16 %v461
    %v597 = vunpack.c.l.b16 %v462
    %v598 = vunpack.c.l.b16 %v463
    %v599 = vunpack.c.l.b16 %v464
    %v600 = vunpack.c.l.b16 %v465
    %v601 = vunpack.c.l.b16 %v466
    %v602 = vunpack.c.l.b16 %v467
    %v603 = vunpack.c.l.b16 %v468
    %v604 = vunpack.c.l.b16 %v469
    %v605 = vunpack.c.l.b16 %v470
    %v606 = vunpack.c.l.b16 %v471
    %v607 = vunpack.c.l.b16 %v472
    %v608 = vunpack.c.l.b16 %v473
    %v609 = vunpack.c.l.b16 %v474
    %v610 = vunpack.c.l.b16 %v475
    %v611 = vunpack.c.l.b16 %v476
    %v612 = vunpack.c.l.b16 %v477
    %v613 = vunpack.c.l.b16 %v478
    %v614 = vunpack.c.l.b16 %v479
    %v615 = vunpack.c.l.b16 %v480
    %v616 = vunpack.c.l.b16 %v481
    %v617 = vunpack.c.l.b16 %v482
    %v618 = vunpack.c.l.b16 %v483
    %v619 = vunpack.c.l.b16 %v484
    %v620 = vunpack.c.l.b16 %v485
    %v621 = vunpack.c.l.b16 %v486
    %v622 = vunpack.c.l.b16 %v487
    %v623 = vunpack.c.l.b16 %v488
    %v624 = vunpack.c.l.b16 %v489
    %v625 = vunpack.c.l.b16 %v490
    %v626 = vunpack.c.l.b16 %v491
    %v627 = vunpack.c.l.b16 %v492
    %v628 = vunpack.c.l.b16 %v493
    %v629 = vunpack.c.l.b16 %v494
    %v630 = vunpack.c.l.b16 %v495
    %v631 = vunpack.c.l.b16 %v496
    %v632 = vunpack.c.l.b16 %v497
    %v633 = vunpack.c.l.b16 %v498
    %v634 = vunpack.c.l.b16 %v499
    %v635 = vunpack.c.l.b16 %v500
    %v636 = vunpack.c.l.b16 %v501
    %v637 = vunpack.c.l.b16 %v502
    %v638 = vunpack.c.l.b16 %v503
    %v639 = vunpack.c.l.b16 %v504
    %v640 = vunpack.c.l.b16 %v505
    %v641 = vpack.c.b16 %v578, %v577
    %v642 = vpack.c.b16 %v580, %v579
    %v643 = vpack.c.b16 %v582, %v581
    %v644 = vpack.c.b16 %v584, %v583
    %v645 = vpack.c.b16 %v586, %v585
    %v646 = vpack.c.b16 %v588, %v587
    %v647 = vpack.c.b16 %v590, %v589
    %v648 = vpack.c.b16 %v592, %v591
    %v649 = vpack.c.b16 %v594, %v593
    %v650 = vpack.c.b16 %v596, %v595
    %v651 = vpack.c.b16 %v598, %v597
    %v652 = vpack.c.b16 %v600, %v599
    %v653 = vpack.c.b16 %v602, %v601
    %v654 = vpack.c.b16 %v604, %v603
    %v655 = vpack.c.b16 %v606, %v605
    %v656 = vpack.c.b16 %v608, %v607
    %v657 = vpack.c.b16 %v610, %v609
    %v658 = vpack.c.b16 %v612, %v611
    %v659 = vpack.c.b16 %v614, %v613
    %v660 = vpack.c.b16 %v616, %v615
    %v661 = vpack.c.b16 %v618, %v617
    %v662 = vpack.c.b16 %v620, %v619
    %v663 = vpack.c.b16 %v622, %v621
    %v664 = vpack.c.b16 %v624, %v623
    %v665 = vpack.c.b16 %v626, %v625
    %v666 = vpack.c.b16 %v628, %v627
    %v667 = vpack.c.b16 %v630, %v629
    %v668 = vpack.c.b16 %v632, %v631
    %v669 = vpack.c.b16 %v634, %v633
    %v670 = vpack.c.b16 %v636, %v635
    %v671 = vpack.c.b16 %v638, %v637
    %v672 = vpack.c.b16 %v640, %v639
    %705 = vmatprep.subr.bf16.mxu0 0
    %706 = vmatpush1.bf16.msra.mxu0 %v641
    %707 = vmatprep.subr.bf16.mxu0 0
    %708 = vmatpush1.bf16.msra.mxu0 %v642
    %709 = vmatprep.subr.bf16.mxu0 0
    %710 = vmatpush1.bf16.msra.mxu0 %v643
    %711 = vmatprep.subr.bf16.mxu0 0
    %712 = vmatpush1.bf16.msra.mxu0 %v644
    %713 = vmatprep.subr.bf16.mxu0 0
    %714 = vmatpush1.bf16.msra.mxu0 %v645
    %715 = vmatprep.subr.bf16.mxu0 0
    %716 = vmatpush1.bf16.msra.mxu0 %v646
    %717 = vmatprep.subr.bf16.mxu0 0
    %718 = vmatpush1.bf16.msra.mxu0 %v647
    %719 = vmatprep.subr.bf16.mxu0 0
    %720 = vmatpush1.bf16.msra.mxu0 %v648
    %721 = vmatprep.subr.bf16.mxu0 0
    %722 = vmatpush1.bf16.msra.mxu0 %v649
    %723 = vmatprep.subr.bf16.mxu0 0
    %724 = vmatpush1.bf16.msra.mxu0 %v650
    %725 = vmatprep.subr.bf16.mxu0 0
    %726 = vmatpush1.bf16.msra.mxu0 %v651
    %727 = vmatprep.subr.bf16.mxu0 0
    %728 = vmatpush1.bf16.msra.mxu0 %v652
    %729 = vmatprep.subr.bf16.mxu0 0
    %730 = vmatpush1.bf16.msra.mxu0 %v653
    %731 = vmatprep.subr.bf16.mxu0 0
    %732 = vmatpush1.bf16.msra.mxu0 %v654
    %733 = vmatprep.subr.bf16.mxu0 0
    %734 = vmatpush1.bf16.msra.mxu0 %v655
    %735 = vmatprep.subr.bf16.mxu0 0
    %736 = vmatpush1.bf16.msra.mxu0 %v656
    %737 = vmatprep.mubr.bf16.mxu0 %v439
    %738 = vmatmul.mubr.bf16.gmra.mrb[0].mxu0 %v438
    %v739 = vpop.f32.mrb[0].mxu0
    %v740 = vadd.f32 %v511, %v739
    %v741 = vpop.f32.mrb[0].mxu0
    %v742 = vpop.f32.mrb[0].mxu0
    %v743 = vadd.f32 %v511, %v742
    %v744 = vpop.f32.mrb[0].mxu0
    %745 = vdwg.mxu0
    %746 = vmatprep.subr.bf16.mxu0 0
    %747 = vmatpush1.bf16.msra.mxu0 %v657
    %748 = vmatprep.subr.bf16.mxu0 0
    %749 = vmatpush1.bf16.msra.mxu0 %v658
    %750 = vmatprep.subr.bf16.mxu0 0
    %751 = vmatpush1.bf16.msra.mxu0 %v659
    %752 = vmatprep.subr.bf16.mxu0 0
    %753 = vmatpush1.bf16.msra.mxu0 %v660
    %754 = vmatprep.subr.bf16.mxu0 0
    %755 = vmatpush1.bf16.msra.mxu0 %v661
    %756 = vmatprep.subr.bf16.mxu0 0
    %757 = vmatpush1.bf16.msra.mxu0 %v662
    %758 = vmatprep.subr.bf16.mxu0 0
    %759 = vmatpush1.bf16.msra.mxu0 %v663
    %760 = vmatprep.subr.bf16.mxu0 0
    %761 = vmatpush1.bf16.msra.mxu0 %v664
    %762 = vmatprep.subr.bf16.mxu0 0
    %763 = vmatpush1.bf16.msra.mxu0 %v665
    %764 = vmatprep.subr.bf16.mxu0 0
    %765 = vmatpush1.bf16.msra.mxu0 %v666
    %766 = vmatprep.subr.bf16.mxu0 0
    %767 = vmatpush1.bf16.msra.mxu0 %v667
    %768 = vmatprep.subr.bf16.mxu0 0
    %769 = vmatpush1.bf16.msra.mxu0 %v668
    %770 = vmatprep.subr.bf16.mxu0 0
    %771 = vmatpush1.bf16.msra.mxu0 %v669
    %772 = vmatprep.subr.bf16.mxu0 0
    %773 = vmatpush1.bf16.msra.mxu0 %v670
    %774 = vmatprep.subr.bf16.mxu0 0
    %775 = vmatpush1.bf16.msra.mxu0 %v671
    %776 = vmatprep.subr.bf16.mxu0 0
    %777 = vmatpush1.bf16.msra.mxu0 %v672
    %778 = vmatprep.mubr.bf16.mxu0 %v441
    %779 = vmatmul.mubr.bf16.gmra.mrb[0].mxu0 %v440
    %v780 = vpop.f32.mrb[0].mxu0
    %v781 = vadd.f32 %v740, %v780
    %v782 = vpop.f32.mrb[0].mxu0
    %v783 = vpop.f32.mrb[0].mxu0
    %v784 = vadd.f32 %v743, %v783
    %v785 = vpop.f32.mrb[0].mxu0
    %786 = vdwg.mxu0
    %787 = vst [vmem:[#allocation8] sm:$0xff] %v781
    %788 = vst [vmem:[#allocation8 + $0x8] sm:$0xff] %v784
    // Predicated region
    $region34: #{mlp_forward.1} parent=1 // pred_check
      _
    $region35: #{mlp_forward.1} parent=1 // pred_check_branch
      %790 = sbr.rel (0) target = $region37
    $region36: #{mlp_forward.1} parent=1 // pred_region
      %s792 = ssub.s32 256, 256
      %793 = vsyncadd [#allocation4], %s792
      %s794 = sshll.u32 [#allocation8], 4
      %s795 = int_to_ptr.vmem [resolvable:$true] %s794
      %800 = dma.vmem_to_hbm [thread:$0]  %s795, 256, %s5, [#allocation4], 128, 128, 8
    $region37: #{mlp_forward.1} parent=1 // pred_fallthru
      _
    // Predicated region
    $region38: #{mlp_forward.1} parent=1 // pred_check
      _
    $region39: #{mlp_forward.1} parent=1 // pred_check_branch
      %802 = sbr.rel (0) target = $region41
    $region40: #{mlp_forward.1} parent=1 // pred_region
      %803 = dma.done [#allocation4], 256
    $region41: #{mlp_forward.1} parent=1 // pred_fallthru
      _
    %804 = vsyncpa [#allocation3], 1
    %805 = vsyncpa [#allocation6], 1
    %806 = vsyncpa [#allocation4], 1

</llo_original>
